<compile_context>
chip_gen: v5e
topology: v5e:2x2
jax: 0.10.0
libtpu: 0.0.40
codegen_flags: <defaults>
</compile_context>

<pallas_src>
import functools
import math

import jax
import jax.numpy as jnp
from jax.experimental import pallas as pl
from jax.experimental.pallas import tpu as pltpu

_LANES = 128
_TARGET_BLOCK_BYTES = 4 << 20  # ~4 MiB per block (8192 f32 rows / 16384 bf16 rows)


def _round_up(x: int, m: int) -> int:
    return ((x + m - 1) // m) * m


def _pick_block_rows(n_rows: int, itemsize: int, max_block_rows) -> int:
    """Dtype-aware row tiling: native (8/16/32, 128) multiples, ~4 MiB blocks,
    >= 4 grid steps when the array is big enough (v7x megacore)."""
    row_mult = max(8, 32 // itemsize)  # 8 for f32, 16 for bf16, 32 for int8/fp8
    cap = max(row_mult,
              (_TARGET_BLOCK_BYTES // (_LANES * itemsize)) // row_mult * row_mult)
    want = _round_up(pl.cdiv(n_rows, 4), row_mult)
    br = max(row_mult, min(cap, want))
    if max_block_rows is not None:
        br = max(row_mult, (min(br, int(max_block_rows)) // row_mult) * row_mult)
    if br >= n_rows:
        return n_rows  # single full-extent block (legal even if not a tile multiple)
    return br


def _zeroth_gamma_pow2_kernel(gamma_ref, c_ref, o_ref, *, m1: int):
    """Fast path: m1 divides 128 (=> power of two).  The zeroth positions depend
    only on the lane index, so build (1,128) scale/offset once and do one
    broadcast FMA per data vreg."""
    c = c_ref[...]
    g = gamma_ref[0]                                             # f32 scalar from SMEM
    lane = jax.lax.broadcasted_iota(jnp.int32, (1, c.shape[1]), 1)
    is_zeroth = (lane & (m1 - 1)) == 0                           # (1, 128)
    scale = jnp.where(is_zeroth, g, 1.0).astype(c.dtype)         # gamma at c0 lanes, 1 elsewhere
    offset = jnp.where(is_zeroth, 1.0, 0.0).astype(c.dtype)      # +1 at c0 lanes, 0 elsewhere
    o_ref[...] = c * scale + offset


def _zeroth_gamma_general_kernel(gamma_ref, c_ref, o_ref, *, m1: int, lanes: int):
    """General m1: per-block scalar base offset (mod m1) + small in-block index
    keeps all vector index math well inside int32 range."""
    c = c_ref[...]
    g = gamma_ref[0].astype(c.dtype)
    block_rows = c.shape[0]
    step_mod = (block_rows * lanes) % m1                         # static python int
    base = ((pl.program_id(0) % m1) * step_mod) % m1             # scalar, < m1
    row = jax.lax.broadcasted_iota(jnp.int32, c.shape, 0)
    lane = jax.lax.broadcasted_iota(jnp.int32, c.shape, 1)
    flat = row * lanes + lane + base                             # bounded by block size + m1
    is_zeroth = (flat % m1) == 0
    o_ref[...] = jnp.where(is_zeroth, c * g + 1, c)


def _tiled_call(kernel, gamma_arr, x2d, block_rows: int, donate: bool):
    n_rows, lanes = x2d.shape
    grid = (pl.cdiv(n_rows, block_rows),)
    block_bytes = block_rows * lanes * x2d.dtype.itemsize
    # 2x (double buffer) * 2 (in + out) * block_bytes, plus margin; stay <= 32 MiB
    # so v7x (32 MiB scoped default, 64 MiB shared) is safe and v5e's 16 MiB
    # default gets raised when blocks are large.
    vmem_limit = int(min(max(4 * block_bytes + (2 << 20), 16 << 20), 32 << 20))
    return pl.pallas_call(
        kernel,
        out_shape=jax.ShapeDtypeStruct((n_rows, lanes), x2d.dtype),
        grid_spec=pl.GridSpec(
            grid=grid,
            in_specs=[
                pl.BlockSpec(memory_space=pltpu.MemorySpace.SMEM),    # gamma scalar
                pl.BlockSpec((block_rows, lanes), lambda i: (i, 0)),  # data
            ],
            out_specs=pl.BlockSpec((block_rows, lanes), lambda i: (i, 0)),
        ),
        compiler_params=pltpu.CompilerParams(
            dimension_semantics=("parallel",),
            vmem_limit_bytes=vmem_limit,
        ),
        input_output_aliases=({1: 0} if donate else {}),
    )(gamma_arr, x2d)


def zeroth_gamma_multiplication(c: jax.Array, gamma, *, max_block_rows=None,
                                donate: bool = False) -> jax.Array:
    """Pallas equivalent of ZerothGammaMultiplication.forward.

    c: array of shape (..., cep_order + 1); returns same shape/dtype with
    c[..., 0] -> c[..., 0] * gamma + 1.  Set donate=True only if the caller
    donates c (in-place column-0 update via buffer aliasing).
    """
    orig_shape = c.shape
    m1 = orig_shape[-1]                      # cep_order + 1
    total = math.prod(orig_shape)
    if total == 0:
        return c

    gamma_arr = jnp.asarray(gamma, dtype=jnp.float32).reshape(1)

    # Lane-dense flat view; pad to a 128 multiple instead of a narrow-lane layout.
    flat = c.reshape(-1)
    pad = (-total) % _LANES
    if pad:
        flat = jnp.pad(flat, (0, pad))
    n_rows = (total + pad) // _LANES
    c2d = flat.reshape(n_rows, _LANES)

    itemsize = jnp.dtype(c.dtype).itemsize
    block_rows = _pick_block_rows(n_rows, itemsize, max_block_rows)

    if _LANES % m1 == 0:
        kernel = functools.partial(_zeroth_gamma_pow2_kernel, m1=m1)
    else:
        kernel = functools.partial(_zeroth_gamma_general_kernel, m1=m1, lanes=_LANES)

    out2d = _tiled_call(kernel, gamma_arr, c2d, block_rows, donate)
    out = out2d.reshape(-1)
    if pad:
        out = out[:total]
    return out.reshape(orig_shape)


def _reference(c: jax.Array, gamma: float) -> jax.Array:
    c0 = c[..., :1]
    c1 = c[..., 1:]
    return jnp.concatenate([c0 * gamma + 1.0, c1], axis=-1)


def _check(c, gamma, atol=1e-6, rtol=1e-6, **kwargs):
    out = jax.block_until_ready(zeroth_gamma_multiplication(c, gamma, **kwargs))
    ref = _reference(c, gamma)
    assert out.shape == c.shape and out.dtype == c.dtype
    assert jnp.allclose(out.astype(jnp.float32), ref.astype(jnp.float32),
                        atol=atol, rtol=rtol), "mismatch vs reference"
    return out


if __name__ == "__main__":
    # Module "parameters": cep_order and gamma are plain scalars (no weights).
    cep_order = 15
    gamma = -0.5

    key = jax.random.PRNGKey(0)
    k0, k1, k2, k3, k4 = jax.random.split(key, 5)

    # 1) Primary small case (pow2 lane-mask path): (batch=2, frames=8, 16).
    c = jax.random.normal(k0, (2, 8, cep_order + 1), dtype=jnp.float32)
    _check(c, gamma)

    # 2) total not a multiple of 128 and m1=25 (pad path + general kernel).
    c_odd = jax.random.normal(k1, (3, 5, 25), dtype=jnp.float32)
    _check(c_odd, gamma)

    # 3) Multi-block pow2 path with a partial last block.
    c_big = jax.random.normal(k2, (5, 16, cep_order + 1), dtype=jnp.float32)
    _check(c_big, gamma, max_block_rows=8)

    # 4) bf16 input (math in bf16, dtype-aware tiling).
    c_bf16 = jax.random.normal(k3, (2, 8, cep_order + 1), dtype=jnp.bfloat16)
    _check(c_bf16, gamma, atol=1e-2, rtol=1e-2)

    # 5) General kernel with multiple blocks (nonzero per-block base offsets).
    c_gen = jax.random.normal(k4, (16, 16, 25), dtype=jnp.float32)
    _check(c_gen, gamma, max_block_rows=16)

    # 6) Aliased (donated) output on the primary case.
    _check(c, gamma, donate=True)

    print("KERNEL_OK")
</pallas_src>

<mosaic_0001>
module attributes {stable_mosaic.version = 11 : i64} {
  func.func @_zeroth_gamma_pow2_kernel(%arg0: i32, %arg1: memref<1xf32, #tpu.memory_space<smem>>, %arg2: memref<2x128xf32, #tpu.memory_space<vmem>>, %arg3: memref<2x128xf32, #tpu.memory_space<vmem>>) attributes {dimension_semantics = [#tpu.dimension_semantics<parallel>], iteration_bounds = array<i64: 1>, scalar_prefetch = 0 : i64, scratch_operands = 0 : i64, tpu.core_type = #tpu.core_type<tc>, window_params = [{transform_indices = @transform_0, window_bounds = array<i64: 1>}, {transform_indices = @transform_1, window_bounds = array<i64: 2, 128>}, {transform_indices = @transform_2, window_bounds = array<i64: 2, 128>}]} {
    %c0 = arith.constant 0 : index
    %c0_0 = arith.constant 0 : index
    %0 = vector.load %arg2[%c0, %c0_0] : memref<2x128xf32, #tpu.memory_space<vmem>>, vector<2x128xf32>
    %c0_1 = arith.constant 0 : index
    %1 = memref.load %arg1[%c0_1] : memref<1xf32, #tpu.memory_space<smem>>
    %2 = tpu.iota {dimensions = array<i32: 1>} : vector<1x128xi32>
    %c15_i32 = arith.constant 15 : i32
    %3 = vector.broadcast %c15_i32 : i32 to vector<1x128xi32>
    %4 = arith.andi %2, %3 : vector<1x128xi32>
    %c0_i32 = arith.constant 0 : i32
    %5 = vector.broadcast %c0_i32 : i32 to vector<1x128xi32>
    %6 = arith.cmpi eq, %4, %5 : vector<1x128xi32>
    %cst = arith.constant 1.000000e+00 : f32
    %7 = vector.broadcast %1 : f32 to vector<1x128xf32>
    %8 = vector.broadcast %cst : f32 to vector<1x128xf32>
    %9 = arith.select %6, %7, %8 : vector<1x128xi1>, vector<1x128xf32>
    %cst_2 = arith.constant 1.000000e+00 : f32
    %cst_3 = arith.constant 0.000000e+00 : f32
    %10 = vector.broadcast %cst_2 : f32 to vector<1x128xf32>
    %11 = vector.broadcast %cst_3 : f32 to vector<1x128xf32>
    %12 = arith.select %6, %10, %11 : vector<1x128xi1>, vector<1x128xf32>
    %13 = vector.broadcast %9 : vector<1x128xf32> to vector<2x128xf32>
    %14 = arith.mulf %0, %13 : vector<2x128xf32>
    %15 = vector.broadcast %12 : vector<1x128xf32> to vector<2x128xf32>
    %16 = arith.addf %14, %15 : vector<2x128xf32>
    %c0_4 = arith.constant 0 : index
    %c0_5 = arith.constant 0 : index
    %17 = vector.load %arg3[%c0_4, %c0_5] : memref<2x128xf32, #tpu.memory_space<vmem>>, vector<2x128xf32>
    tpu.vector_store %arg3[%c0_4, %c0_5], %16 {strides = array<i32>} : memref<2x128xf32, #tpu.memory_space<vmem>>, vector<2x128xf32>,
    return
  }
  func.func @transform_0(%arg0: i32) -> i32 {
    %c0_i32 = arith.constant 0 : i32
    %c0_i32_0 = arith.constant 0 : i32
    return %c0_i32 : i32
  }
  func.func @transform_1(%arg0: i32) -> (i32, i32) {
    %c0_i32 = arith.constant 0 : i32
    %c0_i32_0 = arith.constant 0 : i32
    return %arg0, %c0_i32 : i32, i32
  }
  func.func @transform_2(%arg0: i32) -> (i32, i32) {
    %c0_i32 = arith.constant 0 : i32
    %c0_i32_0 = arith.constant 0 : i32
    return %arg0, %c0_i32 : i32, i32
  }
}

</mosaic_0001>

<llo_original>
// kernel: tpu_custom_call.1
$region0: #{tpu_custom_call.1}
  #allocation0 [shape = 'u32[]', space=smem, size = 0x4, offset = 0x4, fixed_abs, tag = 'smem constant byte address 0x4 - core index']
  #allocation1 [shape = 'u32[72,128]{1,0:T(1,128)}', space=vmem, size = 0x9000, scoped, tag = 'internal scratch']
  #allocation2 [shape = 'f32[1]{0:T(128)S(6)}', space=smem, size = 0x200, scoped, tag = 'scoped memory for tpu_custom_call.1']
  %s0 = inlined_call_operand.<no memory space> [shape: f32[1], index: 0, kind: input, shape index: {}]
  %s1 = inlined_call_operand.vmem [shape: f32[2,128], index: 1, kind: input, shape index: {}]
  %s2 = inlined_call_operand.hbm [shape: f32[2,128], index: 2, kind: output, shape index: {}]
  %s3 = sld [smem:[#allocation0]]
  $region18: #{tpu_custom_call.1} parent=0
    _
  %s5 = ssub.s32 1, %s3
  %s6 = scalar_select 0, %s5, %s3
  %7 = sst [smem:[#allocation2]] %s0
  $region1: #{tpu_custom_call.1} parent=0
    #allocation3 [shape = 'u8[1024]{0}', space=vmem, size = 0x400, scoped, tag = 'output window, operand 0, single buffered']
    #allocation4 [shape = 's32[1]{0}', space=sflag, size = 0x4, scoped, tag = 'scoped memory for tpu_custom_call.1']
    %8 = vsyncpa [#allocation4], 0
    // Predicated region
    $region2: #{tpu_custom_call.1} parent=1 // pred_check
      _
    $region3: #{tpu_custom_call.1} parent=1 // pred_check_branch
      %10 = sbr.rel (0) target = $region5
    $region4: #{tpu_custom_call.1} parent=1 // pred_region
      _
    $region5: #{tpu_custom_call.1} parent=1 // pred_fallthru
      _
    // Predicated region
    $region6: #{tpu_custom_call.1} parent=1 // pred_check
      _
    $region7: #{tpu_custom_call.1} parent=1 // pred_check_branch
      %12 = sbr.rel (0) target = $region9
    $region8: #{tpu_custom_call.1} parent=1 // pred_region
      _
    $region9: #{tpu_custom_call.1} parent=1 // pred_fallthru
      _
    %v13 = vld [vmem:[%s1] sm:$0x3]
    %s14 = sld [smem:[#allocation2]]
    %v15 = vlaneseq
    %v16 = vand.u32 %v15, 127
    %v17 = vand.u32 %v16, 15
    %vm18 = vcmp.eq.s32.totalorder %v17, 0
    %v19 = vstv %s14
    %v20 = vsel %vm18, %v19, 1.0
    %v21 = vsel %vm18, 1.0, 0.0
    %v22 = vmul.f32 %v13, %v20
    %v23 = vadd.f32 %v22, %v21
    %24 = vst [vmem:[#allocation3] sm:$0x3] %v23
    // Predicated region
    $region10: #{tpu_custom_call.1} parent=1 // pred_check
      _
    $region11: #{tpu_custom_call.1} parent=1 // pred_check_branch
      %26 = sbr.rel (0) target = $region13
    $region12: #{tpu_custom_call.1} parent=1 // pred_region
      %28 = vsyncadd [#allocation4], 0
      %s30 = sshll.u32 [#allocation3], 4
      %s31 = int_to_ptr.vmem [resolvable:$true] %s30
      %s32 = sshll.u32 %s2, 4
      %s33 = int_to_ptr.hbm [resolvable:$true] %s32
      %35 = dma.vmem_to_hbm [thread:$0]  %s31, 32, %s33, [#allocation4]
    $region13: #{tpu_custom_call.1} parent=1 // pred_fallthru
      _
    // Predicated region
    $region14: #{tpu_custom_call.1} parent=1 // pred_check
      _
    $region15: #{tpu_custom_call.1} parent=1 // pred_check_branch
      %37 = sbr.rel (0) target = $region17
    $region16: #{tpu_custom_call.1} parent=1 // pred_region
      %39 = dma.done [#allocation4], 32
    $region17: #{tpu_custom_call.1} parent=1 // pred_fallthru
      _
    %40 = vsyncpa [#allocation4], 1

</llo_original>
